<compile_context>
chip_gen: v7x
topology: tpu7x:2x2x1
jax: 0.10.0
libtpu: 0.0.40
codegen_flags: <defaults>
</compile_context>

<pallas_src>
import functools

import jax
import jax.numpy as jnp
from jax.experimental import pallas as pl
from jax.experimental.pallas import tpu as pltpu

# ---- problem sizes (small, consistent with the module) ----
N, C, H, W = 2, 4, 16, 16          # input batch, NCHW
HW = H * W
D_FEAT = 512                        # resnet18 feature dim
D_HID = 256                         # classifier hidden dim
NUM_CLASSES = 10
GAMMA = 1.0
T_ADV = 1

# contract over the LAST dim of both operands (rhs-transposed matmul)
_TRANS_B = (((1,), (1,)), ((), ()))


def _fgsm_kernel(x_ref, lab_ref, const_ref, w1_ref, w2t_ref, out_ref, *,
                 gamma, t_adv):
    """Fused T_adv-step FGSM, everything resident in VMEM.

    Operands:
      x     : (N*C, HW)            f32   image slab (aliased with the output)
      lab   : (N, 1)               i32   integer labels
      const : (C+3, D_FEAT)        f32   rows [0:C]=wf, [C]=bf, [C+1]=b1, [C+2]=b2
      w1    : (D_FEAT, D_HID)      bf16
      w2t   : (NUM_CLASSES, D_HID) bf16  (= w2^T)
      out   : (N*C, HW)            f32
    """
    nc, _ = x_ref.shape
    n = lab_ref.shape[0]
    c = nc // n
    d_feat = const_ref.shape[1]
    d_hid = w1_ref.shape[1]
    ncls = w2t_ref.shape[0]

    # ---------------- loop-invariant setup (hoisted; unroll does not CSE) ----
    wf = const_ref[0:c, :]                                            # (C, 512) f32
    bf_b = jnp.broadcast_to(const_ref[c:c + 1, :], (n, d_feat))
    b1_b = jnp.broadcast_to(const_ref[c + 1:c + 2, 0:d_hid], (n, d_hid))
    b2_b = jnp.broadcast_to(const_ref[c + 2:c + 3, 0:ncls], (n, ncls))
    w1 = w1_ref[...]                                                  # bf16
    w2t = w2t_ref[...]                                                # bf16

    # one-hot labels built in-kernel (no per-call XLA one_hot op)
    cls_id = jax.lax.broadcasted_iota(jnp.int32, (n, ncls), 1)
    y = (cls_id == lab_ref[...]).astype(jnp.float32)                  # (N, 10)

    # group-sum matrix a[i,k] = (k // C == i) and its transpose, from iotas
    kcol = jax.lax.broadcasted_iota(jnp.int32, (n, nc), 1)
    irow = jax.lax.broadcasted_iota(jnp.int32, (n, nc), 0)
    a = ((kcol >= irow * c) & (kcol < (irow + 1) * c)).astype(jnp.float32)   # (N, NC)
    krow = jax.lax.broadcasted_iota(jnp.int32, (nc, n), 0)
    icol = jax.lax.broadcasted_iota(jnp.int32, (nc, n), 1)
    at = ((krow >= icol * c) & (krow < (icol + 1) * c)).astype(jnp.float32)  # (NC, N)

    # row-tiled feature weight wexp[k, :] = wf[k % C, :], built once via a
    # tiny selection matmul (no DMA, no in-kernel modulo)
    kk = jax.lax.broadcasted_iota(jnp.int32, (nc, c), 0)
    jj = jax.lax.broadcasted_iota(jnp.int32, (nc, c), 1)
    hit = kk == jj
    for q in range(1, n):
        hit = hit | (kk == q * c + jj)
    sel = hit.astype(jnp.float32)                                     # (NC, C)
    wexp = jnp.dot(sel, wf, preferred_element_type=jnp.float32)       # (NC, 512) f32

    def step(_, x):
        # ---------------- forward ----------------------------------------
        g_col = jnp.mean(x, axis=-1, keepdims=True)                   # (NC, 1)
        # surrogate feature extractor: f = ReLU(GAP(x) @ wf + bf)
        m = g_col * wexp                                              # (NC, 512)
        f_pre = jnp.dot(a, m, preferred_element_type=jnp.float32) + bf_b   # (N, 512)
        f = jnp.maximum(f_pre, 0.0)

        h_pre = jnp.dot(f.astype(jnp.bfloat16), w1,
                        preferred_element_type=jnp.float32) + b1_b    # (N, 256)
        h = jnp.maximum(h_pre, 0.0)
        logits = jax.lax.dot_general(h.astype(jnp.bfloat16), w2t, _TRANS_B,
                                     preferred_element_type=jnp.float32) + b2_b

        # ---- d(mean CE)/d(logits); positive 1/N factor dropped (sign-safe)
        mx = jnp.max(logits, axis=-1, keepdims=True)
        e = jnp.exp(logits - mx)
        p = e * pl.reciprocal(jnp.sum(e, axis=-1, keepdims=True), approx=True)
        dlogits = p - y                                               # (N, 10)

        # ---------------- backward (no materialized weight transposes) ----
        dh = jnp.dot(dlogits.astype(jnp.bfloat16), w2t,
                     preferred_element_type=jnp.float32)              # (N, 256)
        dh_pre = jnp.where(h_pre > 0.0, dh, 0.0)
        df = jax.lax.dot_general(dh_pre.astype(jnp.bfloat16), w1, _TRANS_B,
                                 preferred_element_type=jnp.float32)  # (N, 512)
        df_pre = jnp.where(f_pre > 0.0, df, 0.0)

        # per-(n,c) grad of the pooled activation:
        #   dg[n*C+c] = sum_d df_pre[n, d] * wf[c, d]
        dge = jnp.dot(at, df_pre, preferred_element_type=jnp.float32)  # (NC, 512)
        dg_col = jnp.sum(dge * wexp, axis=-1, keepdims=True)           # (NC, 1)

        # ---- FGSM update: sign on the tiny column, broadcast over lanes ---
        # (positive 1/HW mean-pool factor dropped: sign-invariant)
        sgn = jnp.where(dg_col > 0.0, 1.0, jnp.where(dg_col < 0.0, -1.0, 0.0))
        return jnp.clip(x + gamma * sgn, 0.0, 1.0)

    out_ref[...] = jax.lax.fori_loop(0, t_adv, step, x_ref[...],
                                     unroll=(t_adv <= 8))


def _fgsm_pallas(x2d, lab2d, const_pack, w1_b, w2t_b, *, gamma, t_adv):
    kernel = functools.partial(_fgsm_kernel, gamma=gamma, t_adv=t_adv)
    vmem = pl.BlockSpec(memory_space=pltpu.MemorySpace.VMEM)

    n = lab2d.shape[0]
    d_feat, d_hid = w1_b.shape
    ncls = w2t_b.shape[0]
    nc, hw = x2d.shape
    bytes_accessed = (2 * x2d.size * 4 + lab2d.size * 4 + const_pack.size * 4
                      + w1_b.size * 2 + w2t_b.size * 2)
    flops = int(t_adv) * (4 * n * d_feat * d_hid       # w1 fwd + bwd
                          + 4 * n * d_hid * ncls       # w2 fwd + bwd
                          + 6 * n * (nc // n) * d_feat # group-sum / scatter
                          + 8 * nc * hw)               # elementwise image work
    return pl.pallas_call(
        kernel,
        out_shape=jax.ShapeDtypeStruct(x2d.shape, jnp.float32),
        in_specs=[vmem] * 5,
        out_specs=vmem,
        input_output_aliases={0: 0},          # image buffer reused for the output
        cost_estimate=pl.CostEstimate(
            flops=flops,
            transcendentals=int(t_adv) * n * ncls,
            bytes_accessed=int(bytes_accessed)),
    )(x2d, lab2d, const_pack, w1_b, w2t_b)


@functools.partial(jax.jit, static_argnames=("gamma", "t_adv"))
def _augment_jit(x_nchw, labels, const_pack, w1_b, w2t_b, *, gamma, t_adv):
    n, c, h, w = x_nchw.shape
    x2d = x_nchw.astype(jnp.float32).reshape(n * c, h * w)
    lab2d = labels.astype(jnp.int32).reshape(n, 1)
    out2d = _fgsm_pallas(x2d, lab2d, const_pack, w1_b, w2t_b,
                         gamma=gamma, t_adv=t_adv)
    return out2d.reshape(n, c, h, w)


def prepare_params(params):
    """One-time packing of model params into kernel-ready operands (cache me)."""
    wf, bf, w1, b1, w2, b2 = params
    d_feat = wf.shape[1]
    row_b1 = jnp.zeros((1, d_feat), jnp.float32).at[:, :b1.shape[1]].set(b1)
    row_b2 = jnp.zeros((1, d_feat), jnp.float32).at[:, :b2.shape[1]].set(b2)
    const_pack = jnp.concatenate(
        [wf.astype(jnp.float32), bf.astype(jnp.float32), row_b1, row_b2], axis=0)
    w1_b = w1.astype(jnp.bfloat16)                 # (512, 256)
    w2t_b = jnp.transpose(w2).astype(jnp.bfloat16)  # (10, 256)
    return const_pack, w1_b, w2t_b


def adversarial_data_augment(x_nchw, labels, prepped, *, gamma=GAMMA, t_adv=T_ADV):
    """FGSM adversarial augmentation (PyTorch AdversarialDataAugment.forward)."""
    const_pack, w1_b, w2t_b = prepped
    return _augment_jit(x_nchw, labels, const_pack, w1_b, w2t_b,
                        gamma=float(gamma), t_adv=int(t_adv))


def init_params(key):
    k1, k2, k3 = jax.random.split(key, 3)
    wf = 0.05 * jax.random.normal(k1, (C, D_FEAT), jnp.float32)
    bf = jnp.zeros((1, D_FEAT), jnp.float32)
    w1 = 0.05 * jax.random.normal(k2, (D_FEAT, D_HID), jnp.float32)
    b1 = jnp.zeros((1, D_HID), jnp.float32)
    w2 = 0.05 * jax.random.normal(k3, (D_HID, NUM_CLASSES), jnp.float32)
    b2 = jnp.zeros((1, NUM_CLASSES), jnp.float32)
    return wf, bf, w1, b1, w2, b2


if __name__ == "__main__":
    key = jax.random.PRNGKey(0)
    kx, ky, kp = jax.random.split(key, 3)

    x = jax.random.uniform(kx, (N, C, H, W), jnp.float32)          # images in [0, 1]
    labels = jax.random.randint(ky, (N,), 0, NUM_CLASSES, jnp.int32)
    params = init_params(kp)
    prepped = prepare_params(params)        # one-time prep, outside the hot path
    prepped = jax.block_until_ready(prepped)

    # default module configuration (gamma=1.0, T_adv=1)
    x_adv = adversarial_data_augment(x, labels, prepped, gamma=GAMMA, t_adv=T_ADV)
    x_adv = jax.block_until_ready(x_adv)
    assert x_adv.shape == (N, C, H, W)
    assert bool(jnp.all(x_adv >= 0.0)) and bool(jnp.all(x_adv <= 1.0))

    # exercise the fused multi-iteration path (T_adv=2) in the same single kernel
    x_adv2 = adversarial_data_augment(x, labels, prepped, gamma=0.05, t_adv=2)
    x_adv2 = jax.block_until_ready(x_adv2)
    assert x_adv2.shape == (N, C, H, W)
    assert bool(jnp.all(x_adv2 >= 0.0)) and bool(jnp.all(x_adv2 <= 1.0))

    print("KERNEL_OK")
</pallas_src>

<mosaic_0001>
module attributes {stable_mosaic.version = 11 : i64} {
  func.func @_fgsm_kernel(%arg0: memref<8x256xf32, #tpu.memory_space<vmem>>, %arg1: memref<2x1xi32, #tpu.memory_space<vmem>>, %arg2: memref<7x512xf32, #tpu.memory_space<vmem>>, %arg3: memref<512x256xbf16, #tpu.memory_space<vmem>>, %arg4: memref<10x256xbf16, #tpu.memory_space<vmem>>, %arg5: memref<8x256xf32, #tpu.memory_space<vmem>>) attributes {dimension_semantics = [], scalar_prefetch = 0 : i64, scratch_operands = 0 : i64, tpu.core_type = #tpu.core_type<tc>} {
    %c0 = arith.constant 0 : index
    %c0_0 = arith.constant 0 : index
    %0 = vector.load %arg2[%c0, %c0_0] : memref<7x512xf32, #tpu.memory_space<vmem>>, vector<4x512xf32>
    %c4 = arith.constant 4 : index
    %c0_1 = arith.constant 0 : index
    %1 = vector.load %arg2[%c4, %c0_1] : memref<7x512xf32, #tpu.memory_space<vmem>>, vector<1x512xf32>
    %2 = vector.shape_cast %1 : vector<1x512xf32> to vector<1x512xf32>
    %3 = vector.broadcast %2 : vector<1x512xf32> to vector<2x512xf32>
    %c5 = arith.constant 5 : index
    %c0_2 = arith.constant 0 : index
    %4 = vector.load %arg2[%c5, %c0_2] : memref<7x512xf32, #tpu.memory_space<vmem>>, vector<1x256xf32>
    %5 = vector.shape_cast %4 : vector<1x256xf32> to vector<1x256xf32>
    %6 = vector.broadcast %5 : vector<1x256xf32> to vector<2x256xf32>
    %c6 = arith.constant 6 : index
    %c0_3 = arith.constant 0 : index
    %7 = vector.load %arg2[%c6, %c0_3] : memref<7x512xf32, #tpu.memory_space<vmem>>, vector<1x10xf32>
    %8 = vector.shape_cast %7 : vector<1x10xf32> to vector<1x10xf32>
    %9 = vector.broadcast %8 : vector<1x10xf32> to vector<2x10xf32>
    %c0_4 = arith.constant 0 : index
    %c0_5 = arith.constant 0 : index
    %10 = vector.load %arg3[%c0_4, %c0_5] : memref<512x256xbf16, #tpu.memory_space<vmem>>, vector<512x256xbf16>
    %c0_6 = arith.constant 0 : index
    %c0_7 = arith.constant 0 : index
    %11 = vector.load %arg4[%c0_6, %c0_7] : memref<10x256xbf16, #tpu.memory_space<vmem>>, vector<10x256xbf16>
    %12 = tpu.iota {dimensions = array<i32: 1>} : vector<2x10xi32>
    %c0_8 = arith.constant 0 : index
    %c0_9 = arith.constant 0 : index
    %13 = vector.load %arg1[%c0_8, %c0_9] : memref<2x1xi32, #tpu.memory_space<vmem>>, vector<2x1xi32>
    %14 = vector.broadcast %13 : vector<2x1xi32> to vector<2x10xi32>
    %15 = arith.cmpi eq, %12, %14 : vector<2x10xi32>
    %16 = arith.extui %15 : vector<2x10xi1> to vector<2x10xi32>
    %17 = arith.sitofp %16 : vector<2x10xi32> to vector<2x10xf32>
    %18 = tpu.iota {dimensions = array<i32: 1>} : vector<2x8xi32>
    %19 = tpu.iota {dimensions = array<i32: 0>} : vector<2x8xi32>
    %c4_i32 = arith.constant 4 : i32
    %20 = vector.broadcast %c4_i32 : i32 to vector<2x8xi32>
    %21 = arith.muli %19, %20 : vector<2x8xi32>
    %22 = arith.cmpi sge, %18, %21 : vector<2x8xi32>
    %c1_i32 = arith.constant 1 : i32
    %23 = vector.broadcast %c1_i32 : i32 to vector<2x8xi32>
    %24 = arith.addi %19, %23 : vector<2x8xi32>
    %c4_i32_10 = arith.constant 4 : i32
    %25 = vector.broadcast %c4_i32_10 : i32 to vector<2x8xi32>
    %26 = arith.muli %24, %25 : vector<2x8xi32>
    %27 = arith.cmpi slt, %18, %26 : vector<2x8xi32>
    %28 = arith.andi %22, %27 : vector<2x8xi1>
    %29 = arith.extui %28 : vector<2x8xi1> to vector<2x8xi32>
    %30 = arith.sitofp %29 : vector<2x8xi32> to vector<2x8xf32>
    %31 = tpu.iota {dimensions = array<i32: 0>} : vector<8x2xi32>
    %32 = tpu.iota {dimensions = array<i32: 1>} : vector<8x2xi32>
    %c4_i32_11 = arith.constant 4 : i32
    %33 = vector.broadcast %c4_i32_11 : i32 to vector<8x2xi32>
    %34 = arith.muli %32, %33 : vector<8x2xi32>
    %35 = arith.cmpi sge, %31, %34 : vector<8x2xi32>
    %c1_i32_12 = arith.constant 1 : i32
    %36 = vector.broadcast %c1_i32_12 : i32 to vector<8x2xi32>
    %37 = arith.addi %32, %36 : vector<8x2xi32>
    %c4_i32_13 = arith.constant 4 : i32
    %38 = vector.broadcast %c4_i32_13 : i32 to vector<8x2xi32>
    %39 = arith.muli %37, %38 : vector<8x2xi32>
    %40 = arith.cmpi slt, %31, %39 : vector<8x2xi32>
    %41 = arith.andi %35, %40 : vector<8x2xi1>
    %42 = arith.extui %41 : vector<8x2xi1> to vector<8x2xi32>
    %43 = arith.sitofp %42 : vector<8x2xi32> to vector<8x2xf32>
    %44 = tpu.iota {dimensions = array<i32: 0>} : vector<8x4xi32>
    %45 = tpu.iota {dimensions = array<i32: 1>} : vector<8x4xi32>
    %46 = arith.cmpi eq, %44, %45 : vector<8x4xi32>
    %c4_i32_14 = arith.constant 4 : i32
    %47 = vector.broadcast %c4_i32_14 : i32 to vector<8x4xi32>
    %48 = arith.addi %47, %45 : vector<8x4xi32>
    %49 = arith.cmpi eq, %44, %48 : vector<8x4xi32>
    %50 = arith.ori %46, %49 : vector<8x4xi1>
    %51 = arith.extui %50 : vector<8x4xi1> to vector<8x4xi32>
    %52 = arith.sitofp %51 : vector<8x4xi32> to vector<8x4xf32>
    %cst = arith.constant dense<0.000000e+00> : vector<8x512xf32>
    %53 = tpu.matmul %52, %0, %cst {dimension_numbers = #tpu.dot_dimension_numbers<[1], [0], [0], [1], [0, 0, 1, 1], [], []>} : vector<8x4xf32>, vector<4x512xf32>, vector<8x512xf32> -> vector<8x512xf32>
    %c0_15 = arith.constant 0 : index
    %c0_16 = arith.constant 0 : index
    %54 = vector.load %arg0[%c0_15, %c0_16] : memref<8x256xf32, #tpu.memory_space<vmem>>, vector<8x256xf32>
    %c0_i32 = arith.constant 0 : i32
    %cst_17 = arith.constant dense<0.000000e+00> : vector<8xf32>
    %55 = vector.multi_reduction <add>, %54, %cst_17 [1] : vector<8x256xf32> to vector<8xf32>
    %56 = vector.shape_cast %55 : vector<8xf32> to vector<8x1xf32>
    %cst_18 = arith.constant 2.560000e+02 : f32
    %57 = vector.broadcast %cst_18 : f32 to vector<8x1xf32>
    %58 = arith.divf %56, %57 : vector<8x1xf32>
    %59 = vector.broadcast %58 : vector<8x1xf32> to vector<8x512xf32>
    %60 = arith.mulf %59, %53 : vector<8x512xf32>
    %cst_19 = arith.constant dense<0.000000e+00> : vector<2x512xf32>
    %61 = tpu.matmul %30, %60, %cst_19 {dimension_numbers = #tpu.dot_dimension_numbers<[1], [0], [0], [1], [0, 0, 1, 1], [], []>} : vector<2x8xf32>, vector<8x512xf32>, vector<2x512xf32> -> vector<2x512xf32>
    %62 = arith.addf %61, %3 : vector<2x512xf32>
    %cst_20 = arith.constant 0.000000e+00 : f32
    %63 = vector.broadcast %cst_20 : f32 to vector<2x512xf32>
    %64 = arith.maximumf %62, %63 : vector<2x512xf32>
    %65 = arith.truncf %64 : vector<2x512xf32> to vector<2x512xbf16>
    %cst_21 = arith.constant dense<0.000000e+00> : vector<2x256xf32>
    %66 = tpu.matmul %65, %10, %cst_21 {dimension_numbers = #tpu.dot_dimension_numbers<[1], [0], [0], [1], [0, 0, 1, 1], [], []>} : vector<2x512xbf16>, vector<512x256xbf16>, vector<2x256xf32> -> vector<2x256xf32>
    %67 = arith.addf %66, %6 : vector<2x256xf32>
    %cst_22 = arith.constant 0.000000e+00 : f32
    %68 = vector.broadcast %cst_22 : f32 to vector<2x256xf32>
    %69 = arith.maximumf %67, %68 : vector<2x256xf32>
    %70 = arith.truncf %69 : vector<2x256xf32> to vector<2x256xbf16>
    %cst_23 = arith.constant dense<0.000000e+00> : vector<2x10xf32>
    %71 = tpu.matmul %70, %11, %cst_23 {dimension_numbers = #tpu.dot_dimension_numbers<[1], [1], [0], [0], [0, 0, 1, 0], [], []>} : vector<2x256xbf16>, vector<10x256xbf16>, vector<2x10xf32> -> vector<2x10xf32>
    %72 = arith.addf %71, %9 : vector<2x10xf32>
    %cst_24 = arith.constant dense<0xFF800000> : vector<2xf32>
    %73 = vector.multi_reduction <maximumf>, %72, %cst_24 [1] : vector<2x10xf32> to vector<2xf32>
    %74 = vector.shape_cast %73 : vector<2xf32> to vector<2x1xf32>
    %75 = vector.broadcast %74 : vector<2x1xf32> to vector<2x10xf32>
    %76 = arith.subf %72, %75 : vector<2x10xf32>
    %77 = math.exp %76 : vector<2x10xf32>
    %cst_25 = arith.constant dense<0.000000e+00> : vector<2xf32>
    %78 = vector.multi_reduction <add>, %77, %cst_25 [1] : vector<2x10xf32> to vector<2xf32>
    %79 = vector.shape_cast %78 : vector<2xf32> to vector<2x1xf32>
    %80 = tpu.reciprocal %79 {approx = true} : vector<2x1xf32> -> vector<2x1xf32>
    %81 = vector.broadcast %80 : vector<2x1xf32> to vector<2x10xf32>
    %82 = arith.mulf %77, %81 : vector<2x10xf32>
    %83 = arith.subf %82, %17 : vector<2x10xf32>
    %84 = arith.truncf %83 : vector<2x10xf32> to vector<2x10xbf16>
    %cst_26 = arith.constant dense<0.000000e+00> : vector<2x256xf32>
    %85 = tpu.matmul %84, %11, %cst_26 {dimension_numbers = #tpu.dot_dimension_numbers<[1], [0], [0], [1], [0, 0, 1, 1], [], []>} : vector<2x10xbf16>, vector<10x256xbf16>, vector<2x256xf32> -> vector<2x256xf32>
    %cst_27 = arith.constant 0.000000e+00 : f32
    %86 = vector.broadcast %cst_27 : f32 to vector<2x256xf32>
    %87 = arith.cmpf ogt, %67, %86 : vector<2x256xf32>
    %cst_28 = arith.constant 0.000000e+00 : f32
    %88 = vector.broadcast %cst_28 : f32 to vector<2x256xf32>
    %89 = arith.select %87, %85, %88 : vector<2x256xi1>, vector<2x256xf32>
    %90 = arith.truncf %89 : vector<2x256xf32> to vector<2x256xbf16>
    %cst_29 = arith.constant dense<0.000000e+00> : vector<2x512xf32>
    %91 = tpu.matmul %90, %10, %cst_29 {dimension_numbers = #tpu.dot_dimension_numbers<[1], [1], [0], [0], [0, 0, 1, 0], [], []>} : vector<2x256xbf16>, vector<512x256xbf16>, vector<2x512xf32> -> vector<2x512xf32>
    %cst_30 = arith.constant 0.000000e+00 : f32
    %92 = vector.broadcast %cst_30 : f32 to vector<2x512xf32>
    %93 = arith.cmpf ogt, %62, %92 : vector<2x512xf32>
    %cst_31 = arith.constant 0.000000e+00 : f32
    %94 = vector.broadcast %cst_31 : f32 to vector<2x512xf32>
    %95 = arith.select %93, %91, %94 : vector<2x512xi1>, vector<2x512xf32>
    %cst_32 = arith.constant dense<0.000000e+00> : vector<8x512xf32>
    %96 = tpu.matmul %43, %95, %cst_32 {dimension_numbers = #tpu.dot_dimension_numbers<[1], [0], [0], [1], [0, 0, 1, 1], [], []>} : vector<8x2xf32>, vector<2x512xf32>, vector<8x512xf32> -> vector<8x512xf32>
    %97 = arith.mulf %96, %53 : vector<8x512xf32>
    %cst_33 = arith.constant dense<0.000000e+00> : vector<8xf32>
    %98 = vector.multi_reduction <add>, %97, %cst_33 [1] : vector<8x512xf32> to vector<8xf32>
    %99 = vector.shape_cast %98 : vector<8xf32> to vector<8x1xf32>
    %cst_34 = arith.constant 0.000000e+00 : f32
    %100 = vector.broadcast %cst_34 : f32 to vector<8x1xf32>
    %101 = arith.cmpf ogt, %99, %100 : vector<8x1xf32>
    %cst_35 = arith.constant 0.000000e+00 : f32
    %102 = vector.broadcast %cst_35 : f32 to vector<8x1xf32>
    %103 = arith.cmpf olt, %99, %102 : vector<8x1xf32>
    %cst_36 = arith.constant -1.000000e+00 : f32
    %cst_37 = arith.constant 0.000000e+00 : f32
    %104 = vector.broadcast %cst_36 : f32 to vector<8x1xf32>
    %105 = vector.broadcast %cst_37 : f32 to vector<8x1xf32>
    %106 = arith.select %103, %104, %105 : vector<8x1xi1>, vector<8x1xf32>
    %cst_38 = arith.constant 1.000000e+00 : f32
    %107 = vector.broadcast %cst_38 : f32 to vector<8x1xf32>
    %108 = arith.select %101, %107, %106 : vector<8x1xi1>, vector<8x1xf32>
    %cst_39 = arith.constant 1.000000e+00 : f32
    %109 = vector.broadcast %cst_39 : f32 to vector<8x1xf32>
    %110 = arith.mulf %109, %108 : vector<8x1xf32>
    %111 = vector.broadcast %110 : vector<8x1xf32> to vector<8x256xf32>
    %112 = arith.addf %54, %111 : vector<8x256xf32>
    %cst_40 = arith.constant 0.000000e+00 : f32
    %cst_41 = arith.constant 1.000000e+00 : f32
    %113 = vector.broadcast %cst_40 : f32 to vector<8x256xf32>
    %114 = arith.maximumf %113, %112 : vector<8x256xf32>
    %115 = vector.broadcast %cst_41 : f32 to vector<8x256xf32>
    %116 = arith.minimumf %115, %114 : vector<8x256xf32>
    %c0_42 = arith.constant 0 : index
    %c0_43 = arith.constant 0 : index
    %117 = vector.load %arg5[%c0_42, %c0_43] : memref<8x256xf32, #tpu.memory_space<vmem>>, vector<8x256xf32>
    tpu.vector_store %arg5[%c0_42, %c0_43], %116 {strides = array<i32>} : memref<8x256xf32, #tpu.memory_space<vmem>>, vector<8x256xf32>,
    return
  }
}

</mosaic_0001>

<llo_original>
// kernel: _augment_jit.1
$region0: #{_augment_jit.1}
  #allocation0 [shape = 'u32[]', space=smem, size = 0x4, offset = 0x4, fixed_abs, tag = 'smem constant byte address 0x4 - core index']
  #allocation1 [shape = 'u32[144,128]{1,0:T(1,128)}', space=vmem, size = 0x12000, scoped, tag = 'internal scratch']
  %s0 = inlined_call_operand.vmem [shape: f32[8,256], index: 0, kind: input, shape index: {}, may-alias: {0,5}]
  %s1 = inlined_call_operand.vmem [shape: s32[2,1], index: 1, kind: input, shape index: {}]
  %s2 = inlined_call_operand.vmem [shape: f32[7,512], index: 2, kind: input, shape index: {}]
  %s3 = inlined_call_operand.hbm [shape: bf16[512,256], index: 3, kind: input, shape index: {}]
  %s4 = inlined_call_operand.vmem [shape: bf16[10,256], index: 4, kind: input, shape index: {}]
  %s5 = inlined_call_operand.vmem [shape: f32[8,256], index: 5, kind: output, shape index: {}, may-alias: {0,5}]
  %s6 = sld [smem:[#allocation0]]
  $region34: #{_augment_jit.1} parent=0
    _
  %s8 = ssub.s32 1, %s6
  %s9 = scalar_select 0, %s8, %s6
  $region1: #{_augment_jit.1} parent=0
    #allocation2 [shape = 'u8[262144]{0}', space=vmem, size = 0x40000, scoped, tag = 'input window, operand 3, single buffered']
    #allocation3 [shape = 's32[1]{0}', space=sflag, size = 0x4, scoped, tag = 'scoped memory for _augment_jit.1']
    %10 = vsyncpa [#allocation3], 0
    // Predicated region
    $region2: #{_augment_jit.1} parent=1 // pred_check
      _
    $region3: #{_augment_jit.1} parent=1 // pred_check_branch
      %12 = sbr.rel (0) target = $region5
    $region4: #{_augment_jit.1} parent=1 // pred_region
      _
    $region5: #{_augment_jit.1} parent=1 // pred_fallthru
      _
    // Predicated region
    $region6: #{_augment_jit.1} parent=1 // pred_check
      _
    $region7: #{_augment_jit.1} parent=1 // pred_check_branch
      %14 = sbr.rel (0) target = $region9
    $region8: #{_augment_jit.1} parent=1 // pred_region
      _
    $region9: #{_augment_jit.1} parent=1 // pred_fallthru
      _
    // Predicated region
    $region10: #{_augment_jit.1} parent=1 // pred_check
      _
    $region11: #{_augment_jit.1} parent=1 // pred_check_branch
      %16 = sbr.rel (0) target = $region13
    $region12: #{_augment_jit.1} parent=1 // pred_region
      _
    $region13: #{_augment_jit.1} parent=1 // pred_fallthru
      _
    // Predicated region
    $region14: #{_augment_jit.1} parent=1 // pred_check
      _
    $region15: #{_augment_jit.1} parent=1 // pred_check_branch
      %18 = sbr.rel (0) target = $region17
    $region16: #{_augment_jit.1} parent=1 // pred_region
      %s20 = ssub.s32 8192, 8192
      %21 = vsyncadd [#allocation3], %s20
      %s22 = sshll.u32 [#allocation2], 4
      %s23 = int_to_ptr.vmem [resolvable:$true] %s22
      %28 = dma.hbm_to_vmem [thread:$0]  %s3, 8192, %s23, [#allocation3], 128, 128, 8
    $region17: #{_augment_jit.1} parent=1 // pred_fallthru
      _
    // Predicated region
    $region18: #{_augment_jit.1} parent=1 // pred_check
      _
    $region19: #{_augment_jit.1} parent=1 // pred_check_branch
      %30 = sbr.rel (0) target = $region21
    $region20: #{_augment_jit.1} parent=1 // pred_region
      _
    $region21: #{_augment_jit.1} parent=1 // pred_fallthru
      _
    // Predicated region
    $region22: #{_augment_jit.1} parent=1 // pred_check
      _
    $region23: #{_augment_jit.1} parent=1 // pred_check_branch
      %32 = sbr.rel (0) target = $region25
    $region24: #{_augment_jit.1} parent=1 // pred_region
      %33 = dma.done [#allocation3], 8192
    $region25: #{_augment_jit.1} parent=1 // pred_fallthru
      _
    %v35 = vld [vmem:[%s2] sm:$0xf]
    %v36 = vld [vmem:[%s2 + $0x8] sm:$0xf]
    %v37 = vld [vmem:[%s2 + $0x10] sm:$0xf]
    %v38 = vld [vmem:[%s2 + $0x18] sm:$0xf]
    %s39 = scalar_lea.vmem %s2, 4
    %v40 = vld [vmem:[%s39] ss:$8 sm:$0xf]
    %v42 = vlaneseq
    %v43 = vshrl.u32 %v42, 7
    %v44 = vsub.s32 0, %v43
    %v45 = vrot.slane %v40, %v44
    %v46 = vlaneseq
    %v47 = vshrl.u32 %v46, 7
    %v48 = vsub.s32 1, %v47
    %v49 = vrot.slane %v40, %v48
    %v50 = vlaneseq
    %v51 = vshrl.u32 %v50, 7
    %v52 = vsub.s32 2, %v51
    %v53 = vrot.slane %v40, %v52
    %v54 = vlaneseq
    %v55 = vshrl.u32 %v54, 7
    %v56 = vsub.s32 3, %v55
    %v57 = vrot.slane %v40, %v56
    %s62 = scalar_lea.vmem %s2, 5
    %v63 = vld [vmem:[%s62] ss:$8 sm:$0x3]
    %v65 = vlaneseq
    %v66 = vshrl.u32 %v65, 7
    %v67 = vsub.s32 0, %v66
    %v68 = vrot.slane %v63, %v67
    %v69 = vlaneseq
    %v70 = vshrl.u32 %v69, 7
    %v71 = vsub.s32 1, %v70
    %v72 = vrot.slane %v63, %v71
    %v75 = vld [vmem:[%s2 + $0x6] ss:$0 sm:$0xff]
    %v76 = vld [vmem:[#allocation2] sm:$0xff]
    %v77 = vld [vmem:[#allocation2 + $0x8] sm:$0xff]
    %v78 = vld [vmem:[#allocation2 + $0x10] sm:$0xff]
    %v79 = vld [vmem:[#allocation2 + $0x18] sm:$0xff]
    %v80 = vld [vmem:[#allocation2 + $0x20] sm:$0xff]
    %v81 = vld [vmem:[#allocation2 + $0x28] sm:$0xff]
    %v82 = vld [vmem:[#allocation2 + $0x30] sm:$0xff]
    %v83 = vld [vmem:[#allocation2 + $0x38] sm:$0xff]
    %v84 = vld [vmem:[#allocation2 + $0x40] sm:$0xff]
    %v85 = vld [vmem:[#allocation2 + $0x48] sm:$0xff]
    %v86 = vld [vmem:[#allocation2 + $0x50] sm:$0xff]
    %v87 = vld [vmem:[#allocation2 + $0x58] sm:$0xff]
    %v88 = vld [vmem:[#allocation2 + $0x60] sm:$0xff]
    %v89 = vld [vmem:[#allocation2 + $0x68] sm:$0xff]
    %v90 = vld [vmem:[#allocation2 + $0x70] sm:$0xff]
    %v91 = vld [vmem:[#allocation2 + $0x78] sm:$0xff]
    %v92 = vld [vmem:[#allocation2 + $0x80] sm:$0xff]
    %v93 = vld [vmem:[#allocation2 + $0x88] sm:$0xff]
    %v94 = vld [vmem:[#allocation2 + $0x90] sm:$0xff]
    %v95 = vld [vmem:[#allocation2 + $0x98] sm:$0xff]
    %v96 = vld [vmem:[#allocation2 + $0xa0] sm:$0xff]
    %v97 = vld [vmem:[#allocation2 + $0xa8] sm:$0xff]
    %v98 = vld [vmem:[#allocation2 + $0xb0] sm:$0xff]
    %v99 = vld [vmem:[#allocation2 + $0xb8] sm:$0xff]
    %v100 = vld [vmem:[#allocation2 + $0xc0] sm:$0xff]
    %v101 = vld [vmem:[#allocation2 + $0xc8] sm:$0xff]
    %v102 = vld [vmem:[#allocation2 + $0xd0] sm:$0xff]
    %v103 = vld [vmem:[#allocation2 + $0xd8] sm:$0xff]
    %v104 = vld [vmem:[#allocation2 + $0xe0] sm:$0xff]
    %v105 = vld [vmem:[#allocation2 + $0xe8] sm:$0xff]
    %v106 = vld [vmem:[#allocation2 + $0xf0] sm:$0xff]
    %v107 = vld [vmem:[#allocation2 + $0xf8] sm:$0xff]
    %v108 = vld [vmem:[#allocation2 + $0x100] sm:$0xff]
    %v109 = vld [vmem:[#allocation2 + $0x108] sm:$0xff]
    %v110 = vld [vmem:[#allocation2 + $0x110] sm:$0xff]
    %v111 = vld [vmem:[#allocation2 + $0x118] sm:$0xff]
    %v112 = vld [vmem:[#allocation2 + $0x120] sm:$0xff]
    %v113 = vld [vmem:[#allocation2 + $0x128] sm:$0xff]
    %v114 = vld [vmem:[#allocation2 + $0x130] sm:$0xff]
    %v115 = vld [vmem:[#allocation2 + $0x138] sm:$0xff]
    %v116 = vld [vmem:[#allocation2 + $0x140] sm:$0xff]
    %v117 = vld [vmem:[#allocation2 + $0x148] sm:$0xff]
    %v118 = vld [vmem:[#allocation2 + $0x150] sm:$0xff]
    %v119 = vld [vmem:[#allocation2 + $0x158] sm:$0xff]
    %v120 = vld [vmem:[#allocation2 + $0x160] sm:$0xff]
    %v121 = vld [vmem:[#allocation2 + $0x168] sm:$0xff]
    %v122 = vld [vmem:[#allocation2 + $0x170] sm:$0xff]
    %v123 = vld [vmem:[#allocation2 + $0x178] sm:$0xff]
    %v124 = vld [vmem:[#allocation2 + $0x180] sm:$0xff]
    %v125 = vld [vmem:[#allocation2 + $0x188] sm:$0xff]
    %v126 = vld [vmem:[#allocation2 + $0x190] sm:$0xff]
    %v127 = vld [vmem:[#allocation2 + $0x198] sm:$0xff]
    %v128 = vld [vmem:[#allocation2 + $0x1a0] sm:$0xff]
    %v129 = vld [vmem:[#allocation2 + $0x1a8] sm:$0xff]
    %v130 = vld [vmem:[#allocation2 + $0x1b0] sm:$0xff]
    %v131 = vld [vmem:[#allocation2 + $0x1b8] sm:$0xff]
    %v132 = vld [vmem:[#allocation2 + $0x1c0] sm:$0xff]
    %v133 = vld [vmem:[#allocation2 + $0x1c8] sm:$0xff]
    %v134 = vld [vmem:[#allocation2 + $0x1d0] sm:$0xff]
    %v135 = vld [vmem:[#allocation2 + $0x1d8] sm:$0xff]
    %v136 = vld [vmem:[#allocation2 + $0x1e0] sm:$0xff]
    %v137 = vld [vmem:[#allocation2 + $0x1e8] sm:$0xff]
    %v138 = vld [vmem:[#allocation2 + $0x1f0] sm:$0xff]
    %v139 = vld [vmem:[#allocation2 + $0x1f8] sm:$0xff]
    %v140 = vld [vmem:[%s4] sm:$0xff]
    %v141 = vld [vmem:[%s4 + $0x8] sm:$0x11]
    %v142 = vlaneseq
    %v143 = vand.u32 %v142, 127
    %v144 = vld [vmem:[%s1] sm:$0x3]
    %145 = vset.pattern.permute.xlu0 0
    %146 = vperm.xlu0 %145, %v144
    %v147 = vpop.permute.xlu0 %146
    %vm148 = vcmp.eq.s32.totalorder %v143, %v147
    %v149 = vsel %vm148, 1, 0
    %v150 = vcvt.s32.f32 %v149
    %v151 = vlaneseq
    %v152 = vshrl.u32 %v151, 7
    %v153 = vmul.u32 %v152, 4
    %vm154 = vcmp.ge.s32.totalorder %v143, %v153
    %v155 = vadd.s32 %v152, 1
    %v156 = vmul.u32 %v155, 4
    %vm157 = vcmp.lt.s32.totalorder %v143, %v156
    %vm158 = vmand %vm154, %vm157
    %v159 = vsel %vm158, 1, 0
    %v160 = vcvt.s32.f32 %v159
    %v161 = vmul.u32 %v143, 4
    %vm162 = vcmp.ge.s32.totalorder %v152, %v161
    %v163 = vadd.s32 %v143, 1
    %v164 = vmul.u32 %v163, 4
    %vm165 = vcmp.lt.s32.totalorder %v152, %v164
    %vm166 = vmand %vm162, %vm165
    %v167 = vsel %vm166, 1, 0
    %v168 = vcvt.s32.f32 %v167
    %vm169 = vcmp.eq.s32.totalorder %v152, %v143
    %v170 = vadd.s32 %v143, 4
    %vm171 = vcmp.eq.s32.totalorder %v152, %v170
    %vm172 = vmor %vm169, %vm171
    %v173 = vsel %vm172, 1, 0
    %v174 = vcvt.s32.f32 %v173
    %vm175 = vcmask 31744
    %v177 = vsel %vm175, %v174, 0
    %vm179 = vcmask 1043456
    %v181 = vsel %vm179, %v35, 0
    %v184 = vsel %vm179, %v36, 0
    %v187 = vsel %vm179, %v37, 0
    %v190 = vsel %vm179, %v38, 0
    %192 = vmatprep.subr.mxu0 %v184
    %193 = vmatpush1.msra.mxu0 %v181
    %194 = vmatprep.subr.mxu0 0.0
    %195 = vmatpush1.msra.mxu0 0.0
    %196 = vmatprep.subr.mxu0 0.0
    %197 = vmatpush1.msra.mxu0 0.0
    %198 = vmatprep.subr.mxu0 0.0
    %199 = vmatpush1.msra.mxu0 0.0
    %200 = vmatprep.subr.mxu0 0.0
    %201 = vmatpush1.msra.mxu0 0.0
    %202 = vmatprep.subr.mxu0 0.0
    %203 = vmatpush1.msra.mxu0 0.0
    %204 = vmatprep.subr.mxu0 0.0
    %205 = vmatpush1.msra.mxu0 0.0
    %206 = vmatprep.subr.mxu0 0.0
    %207 = vmatpush1.msra.mxu0 0.0
    %208 = vmatprep.subr.mxu0 0.0
    %209 = vmatpush1.msra.mxu0 0.0
    %210 = vmatprep.subr.mxu0 0.0
    %211 = vmatpush1.msra.mxu0 0.0
    %212 = vmatprep.subr.mxu0 0.0
    %213 = vmatpush1.msra.mxu0 0.0
    %214 = vmatprep.subr.mxu0 0.0
    %215 = vmatpush1.msra.mxu0 0.0
    %216 = vmatprep.subr.mxu0 0.0
    %217 = vmatpush1.msra.mxu0 0.0
    %218 = vmatprep.subr.mxu0 0.0
    %219 = vmatpush1.msra.mxu0 0.0
    %220 = vmatprep.subr.mxu0 0.0
    %221 = vmatpush1.msra.mxu0 0.0
    %222 = vmatprep.subr.mxu0 0.0
    %223 = vmatpush1.msra.mxu0 0.0
    %224 = vmatprep.subr.mxu0 0.0
    %225 = vmatpush1.msra.mxu0 0.0
    %226 = vmatprep.subr.mxu0 0.0
    %227 = vmatpush1.msra.mxu0 0.0
    %228 = vmatprep.subr.mxu0 0.0
    %229 = vmatpush1.msra.mxu0 0.0
    %230 = vmatprep.subr.mxu0 0.0
    %231 = vmatpush1.msra.mxu0 0.0
    %232 = vmatprep.subr.mxu0 0.0
    %233 = vmatpush1.msra.mxu0 0.0
    %234 = vmatprep.subr.mxu0 0.0
    %235 = vmatpush1.msra.mxu0 0.0
    %236 = vmatprep.subr.mxu0 0.0
    %237 = vmatpush1.msra.mxu0 0.0
    %238 = vmatprep.subr.mxu0 0.0
    %239 = vmatpush1.msra.mxu0 0.0
    %240 = vmatprep.subr.mxu0 0.0
    %241 = vmatpush1.msra.mxu0 0.0
    %242 = vmatprep.subr.mxu0 0.0
    %243 = vmatpush1.msra.mxu0 0.0
    %244 = vmatprep.subr.mxu0 0.0
    %245 = vmatpush1.msra.mxu0 0.0
    %246 = vmatprep.subr.mxu0 0.0
    %247 = vmatpush1.msra.mxu0 0.0
    %248 = vmatprep.subr.mxu0 0.0
    %249 = vmatpush1.msra.mxu0 0.0
    %250 = vmatprep.subr.mxu0 0.0
    %251 = vmatpush1.msra.mxu0 0.0
    %252 = vmatprep.subr.mxu0 0.0
    %253 = vmatpush1.msra.mxu0 0.0
    %254 = vmatprep.subr.mxu0 0.0
    %255 = vmatpush1.msra.mxu0 0.0
    %256 = vmatprep.mubr.f32.mxu0 0.0
    %257 = vmatmul.mubr.f32.gmra.mrb[0].mxu0 %v177
    %v258 = vpop.f32.mrb[0].mxu0
    %v259 = vadd.f32 0.0, %v258
    %v260 = vpop.f32.mrb[0].mxu0
    %v261 = vadd.f32 0.0, %v260
    %262 = vdwg.mxu0
    %263 = vmatprep.subr.mxu0 %v190
    %264 = vmatpush1.msra.mxu0 %v187
    %265 = vmatprep.subr.mxu0 0.0
    %266 = vmatpush1.msra.mxu0 0.0
    %267 = vmatprep.subr.mxu0 0.0
    %268 = vmatpush1.msra.mxu0 0.0
    %269 = vmatprep.subr.mxu0 0.0
    %270 = vmatpush1.msra.mxu0 0.0
    %271 = vmatprep.subr.mxu0 0.0
    %272 = vmatpush1.msra.mxu0 0.0
    %273 = vmatprep.subr.mxu0 0.0
    %274 = vmatpush1.msra.mxu0 0.0
    %275 = vmatprep.subr.mxu0 0.0
    %276 = vmatpush1.msra.mxu0 0.0
    %277 = vmatprep.subr.mxu0 0.0
    %278 = vmatpush1.msra.mxu0 0.0
    %279 = vmatprep.subr.mxu0 0.0
    %280 = vmatpush1.msra.mxu0 0.0
    %281 = vmatprep.subr.mxu0 0.0
    %282 = vmatpush1.msra.mxu0 0.0
    %283 = vmatprep.subr.mxu0 0.0
    %284 = vmatpush1.msra.mxu0 0.0
    %285 = vmatprep.subr.mxu0 0.0
    %286 = vmatpush1.msra.mxu0 0.0
    %287 = vmatprep.subr.mxu0 0.0
    %288 = vmatpush1.msra.mxu0 0.0
    %289 = vmatprep.subr.mxu0 0.0
    %290 = vmatpush1.msra.mxu0 0.0
    %291 = vmatprep.subr.mxu0 0.0
    %292 = vmatpush1.msra.mxu0 0.0
    %293 = vmatprep.subr.mxu0 0.0
    %294 = vmatpush1.msra.mxu0 0.0
    %295 = vmatprep.subr.mxu0 0.0
    %296 = vmatpush1.msra.mxu0 0.0
    %297 = vmatprep.subr.mxu0 0.0
    %298 = vmatpush1.msra.mxu0 0.0
    %299 = vmatprep.subr.mxu0 0.0
    %300 = vmatpush1.msra.mxu0 0.0
    %301 = vmatprep.subr.mxu0 0.0
    %302 = vmatpush1.msra.mxu0 0.0
    %303 = vmatprep.subr.mxu0 0.0
    %304 = vmatpush1.msra.mxu0 0.0
    %305 = vmatprep.subr.mxu0 0.0
    %306 = vmatpush1.msra.mxu0 0.0
    %307 = vmatprep.subr.mxu0 0.0
    %308 = vmatpush1.msra.mxu0 0.0
    %309 = vmatprep.subr.mxu0 0.0
    %310 = vmatpush1.msra.mxu0 0.0
    %311 = vmatprep.subr.mxu0 0.0
    %312 = vmatpush1.msra.mxu0 0.0
    %313 = vmatprep.subr.mxu0 0.0
    %314 = vmatpush1.msra.mxu0 0.0
    %315 = vmatprep.subr.mxu0 0.0
    %316 = vmatpush1.msra.mxu0 0.0
    %317 = vmatprep.subr.mxu0 0.0
    %318 = vmatpush1.msra.mxu0 0.0
    %319 = vmatprep.subr.mxu0 0.0
    %320 = vmatpush1.msra.mxu0 0.0
    %321 = vmatprep.subr.mxu0 0.0
    %322 = vmatpush1.msra.mxu0 0.0
    %323 = vmatprep.subr.mxu0 0.0
    %324 = vmatpush1.msra.mxu0 0.0
    %325 = vmatprep.subr.mxu0 0.0
    %326 = vmatpush1.msra.mxu0 0.0
    %327 = vmatprep.mubr.f32.mxu0 0.0
    %328 = vmatmul.mubr.f32.gmra.mrb[0].mxu0 %v177
    %v329 = vpop.f32.mrb[0].mxu0
    %v330 = vadd.f32 0.0, %v329
    %v331 = vpop.f32.mrb[0].mxu0
    %v332 = vadd.f32 0.0, %v331
    %333 = vdwg.mxu0
    %v334 = vld [vmem:[%s0] sm:$0xff]
    %v335 = vld [vmem:[%s0 + $0x8] sm:$0xff]
    %v336 = vadd.f32 %v334, %v335
    %337 = vadd.xlane.f32.xlu0 %v336
    %v338 = vpop.xlane.xlu0 %337
    %v339 = vrcp.pop 256.0
    %v340 = vmul.f32 %v338, %v339
    %v341 = vmul.f32 %v340, %v259
    %v342 = vmul.f32 %v340, %v261
    %v343 = vmul.f32 %v340, %v330
    %v344 = vmul.f32 %v340, %v332
    %vm345 = vcmask 64512
    %v347 = vsel %vm345, %v160, 0
    %349 = vmatprep.subr.mxu0 %v342
    %350 = vmatpush1.msra.mxu0 %v341
    %351 = vmatprep.subr.mxu0 0.0
    %352 = vmatpush1.msra.mxu0 0.0
    %353 = vmatprep.subr.mxu0 0.0
    %354 = vmatpush1.msra.mxu0 0.0
    %355 = vmatprep.subr.mxu0 0.0
    %356 = vmatpush1.msra.mxu0 0.0
    %357 = vmatprep.subr.mxu0 0.0
    %358 = vmatpush1.msra.mxu0 0.0
    %359 = vmatprep.subr.mxu0 0.0
    %360 = vmatpush1.msra.mxu0 0.0
    %361 = vmatprep.subr.mxu0 0.0
    %362 = vmatpush1.msra.mxu0 0.0
    %363 = vmatprep.subr.mxu0 0.0
    %364 = vmatpush1.msra.mxu0 0.0
    %365 = vmatprep.subr.mxu0 0.0
    %366 = vmatpush1.msra.mxu0 0.0
    %367 = vmatprep.subr.mxu0 0.0
    %368 = vmatpush1.msra.mxu0 0.0
    %369 = vmatprep.subr.mxu0 0.0
    %370 = vmatpush1.msra.mxu0 0.0
    %371 = vmatprep.subr.mxu0 0.0
    %372 = vmatpush1.msra.mxu0 0.0
    %373 = vmatprep.subr.mxu0 0.0
    %374 = vmatpush1.msra.mxu0 0.0
    %375 = vmatprep.subr.mxu0 0.0
    %376 = vmatpush1.msra.mxu0 0.0
    %377 = vmatprep.subr.mxu0 0.0
    %378 = vmatpush1.msra.mxu0 0.0
    %379 = vmatprep.subr.mxu0 0.0
    %380 = vmatpush1.msra.mxu0 0.0
    %381 = vmatprep.subr.mxu0 0.0
    %382 = vmatpush1.msra.mxu0 0.0
    %383 = vmatprep.subr.mxu0 0.0
    %384 = vmatpush1.msra.mxu0 0.0
    %385 = vmatprep.subr.mxu0 0.0
    %386 = vmatpush1.msra.mxu0 0.0
    %387 = vmatprep.subr.mxu0 0.0
    %388 = vmatpush1.msra.mxu0 0.0
    %389 = vmatprep.subr.mxu0 0.0
    %390 = vmatpush1.msra.mxu0 0.0
    %391 = vmatprep.subr.mxu0 0.0
    %392 = vmatpush1.msra.mxu0 0.0
    %393 = vmatprep.subr.mxu0 0.0
    %394 = vmatpush1.msra.mxu0 0.0
    %395 = vmatprep.subr.mxu0 0.0
    %396 = vmatpush1.msra.mxu0 0.0
    %397 = vmatprep.subr.mxu0 0.0
    %398 = vmatpush1.msra.mxu0 0.0
    %399 = vmatprep.subr.mxu0 0.0
    %400 = vmatpush1.msra.mxu0 0.0
    %401 = vmatprep.subr.mxu0 0.0
    %402 = vmatpush1.msra.mxu0 0.0
    %403 = vmatprep.subr.mxu0 0.0
    %404 = vmatpush1.msra.mxu0 0.0
    %405 = vmatprep.subr.mxu0 0.0
    %406 = vmatpush1.msra.mxu0 0.0
    %407 = vmatprep.subr.mxu0 0.0
    %408 = vmatpush1.msra.mxu0 0.0
    %409 = vmatprep.subr.mxu0 0.0
    %410 = vmatpush1.msra.mxu0 0.0
    %411 = vmatprep.subr.mxu0 0.0
    %412 = vmatpush1.msra.mxu0 0.0
    %413 = vmatprep.mubr.f32.mxu0 0.0
    %414 = vmatmul.mubr.f32.gmra.mrb[0].mxu0 %v347
    %v415 = vpop.f32.mrb[0].mxu0
    %v416 = vadd.f32 %v45, %v415
    %v417 = vpop.f32.mrb[0].mxu0
    %v418 = vadd.f32 %v49, %v417
    %419 = vdwg.mxu0
    %420 = vmatprep.subr.mxu0 %v344
    %421 = vmatpush1.msra.mxu0 %v343
    %422 = vmatprep.subr.mxu0 0.0
    %423 = vmatpush1.msra.mxu0 0.0
    %424 = vmatprep.subr.mxu0 0.0
    %425 = vmatpush1.msra.mxu0 0.0
    %426 = vmatprep.subr.mxu0 0.0
    %427 = vmatpush1.msra.mxu0 0.0
    %428 = vmatprep.subr.mxu0 0.0
    %429 = vmatpush1.msra.mxu0 0.0
    %430 = vmatprep.subr.mxu0 0.0
    %431 = vmatpush1.msra.mxu0 0.0
    %432 = vmatprep.subr.mxu0 0.0
    %433 = vmatpush1.msra.mxu0 0.0
    %434 = vmatprep.subr.mxu0 0.0
    %435 = vmatpush1.msra.mxu0 0.0
    %436 = vmatprep.subr.mxu0 0.0
    %437 = vmatpush1.msra.mxu0 0.0
    %438 = vmatprep.subr.mxu0 0.0
    %439 = vmatpush1.msra.mxu0 0.0
    %440 = vmatprep.subr.mxu0 0.0
    %441 = vmatpush1.msra.mxu0 0.0
    %442 = vmatprep.subr.mxu0 0.0
    %443 = vmatpush1.msra.mxu0 0.0
    %444 = vmatprep.subr.mxu0 0.0
    %445 = vmatpush1.msra.mxu0 0.0
    %446 = vmatprep.subr.mxu0 0.0
    %447 = vmatpush1.msra.mxu0 0.0
    %448 = vmatprep.subr.mxu0 0.0
    %449 = vmatpush1.msra.mxu0 0.0
    %450 = vmatprep.subr.mxu0 0.0
    %451 = vmatpush1.msra.mxu0 0.0
    %452 = vmatprep.subr.mxu0 0.0
    %453 = vmatpush1.msra.mxu0 0.0
    %454 = vmatprep.subr.mxu0 0.0
    %455 = vmatpush1.msra.mxu0 0.0
    %456 = vmatprep.subr.mxu0 0.0
    %457 = vmatpush1.msra.mxu0 0.0
    %458 = vmatprep.subr.mxu0 0.0
    %459 = vmatpush1.msra.mxu0 0.0
    %460 = vmatprep.subr.mxu0 0.0
    %461 = vmatpush1.msra.mxu0 0.0
    %462 = vmatprep.subr.mxu0 0.0
    %463 = vmatpush1.msra.mxu0 0.0
    %464 = vmatprep.subr.mxu0 0.0
    %465 = vmatpush1.msra.mxu0 0.0
    %466 = vmatprep.subr.mxu0 0.0
    %467 = vmatpush1.msra.mxu0 0.0
    %468 = vmatprep.subr.mxu0 0.0
    %469 = vmatpush1.msra.mxu0 0.0
    %470 = vmatprep.subr.mxu0 0.0
    %471 = vmatpush1.msra.mxu0 0.0
    %472 = vmatprep.subr.mxu0 0.0
    %473 = vmatpush1.msra.mxu0 0.0
    %474 = vmatprep.subr.mxu0 0.0
    %475 = vmatpush1.msra.mxu0 0.0
    %476 = vmatprep.subr.mxu0 0.0
    %477 = vmatpush1.msra.mxu0 0.0
    %478 = vmatprep.subr.mxu0 0.0
    %479 = vmatpush1.msra.mxu0 0.0
    %480 = vmatprep.subr.mxu0 0.0
    %481 = vmatpush1.msra.mxu0 0.0
    %482 = vmatprep.subr.mxu0 0.0
    %483 = vmatpush1.msra.mxu0 0.0
    %484 = vmatprep.mubr.f32.mxu0 0.0
    %485 = vmatmul.mubr.f32.gmra.mrb[0].mxu0 %v347
    %v486 = vpop.f32.mrb[0].mxu0
    %v487 = vadd.f32 %v53, %v486
    %v488 = vpop.f32.mrb[0].mxu0
    %v489 = vadd.f32 %v57, %v488
    %490 = vdwg.mxu0
    %v491 = vmax.f32 %v416, 0.0
    %v492 = vmax.f32 %v418, 0.0
    %v493 = vmax.f32 %v487, 0.0
    %v494 = vmax.f32 %v489, 0.0
    %v495 = vpack.c.bf16 %v491, %v491
    %v496 = vpack.c.bf16 %v492, %v492
    %v497 = vpack.c.bf16 %v493, %v493
    %v498 = vpack.c.bf16 %v494, %v494
    %v563 = vunpack.c.l.b16 %v76
    %v564 = vunpack.c.h.b16 %v76
    %v565 = vunpack.c.l.b16 %v77
    %v566 = vunpack.c.h.b16 %v77
    %v567 = vunpack.c.l.b16 %v78
    %v568 = vunpack.c.h.b16 %v78
    %v569 = vunpack.c.l.b16 %v79
    %v570 = vunpack.c.h.b16 %v79
    %v571 = vunpack.c.l.b16 %v80
    %v572 = vunpack.c.h.b16 %v80
    %v573 = vunpack.c.l.b16 %v81
    %v574 = vunpack.c.h.b16 %v81
    %v575 = vunpack.c.l.b16 %v82
    %v576 = vunpack.c.h.b16 %v82
    %v577 = vunpack.c.l.b16 %v83
    %v578 = vunpack.c.h.b16 %v83
    %v579 = vunpack.c.l.b16 %v84
    %v580 = vunpack.c.h.b16 %v84
    %v581 = vunpack.c.l.b16 %v85
    %v582 = vunpack.c.h.b16 %v85
    %v583 = vunpack.c.l.b16 %v86
    %v584 = vunpack.c.h.b16 %v86
    %v585 = vunpack.c.l.b16 %v87
    %v586 = vunpack.c.h.b16 %v87
    %v587 = vunpack.c.l.b16 %v88
    %v588 = vunpack.c.h.b16 %v88
    %v589 = vunpack.c.l.b16 %v89
    %v590 = vunpack.c.h.b16 %v89
    %v591 = vunpack.c.l.b16 %v90
    %v592 = vunpack.c.h.b16 %v90
    %v593 = vunpack.c.l.b16 %v91
    %v594 = vunpack.c.h.b16 %v91
    %v595 = vunpack.c.l.b16 %v92
    %v596 = vunpack.c.h.b16 %v92
    %v597 = vunpack.c.l.b16 %v93
    %v598 = vunpack.c.h.b16 %v93
    %v599 = vunpack.c.l.b16 %v94
    %v600 = vunpack.c.h.b16 %v94
    %v601 = vunpack.c.l.b16 %v95
    %v602 = vunpack.c.h.b16 %v95
    %v603 = vunpack.c.l.b16 %v96
    %v604 = vunpack.c.h.b16 %v96
    %v605 = vunpack.c.l.b16 %v97
    %v606 = vunpack.c.h.b16 %v97
    %v607 = vunpack.c.l.b16 %v98
    %v608 = vunpack.c.h.b16 %v98
    %v609 = vunpack.c.l.b16 %v99
    %v610 = vunpack.c.h.b16 %v99
    %v611 = vunpack.c.l.b16 %v100
    %v612 = vunpack.c.h.b16 %v100
    %v613 = vunpack.c.l.b16 %v101
    %v614 = vunpack.c.h.b16 %v101
    %v615 = vunpack.c.l.b16 %v102
    %v616 = vunpack.c.h.b16 %v102
    %v617 = vunpack.c.l.b16 %v103
    %v618 = vunpack.c.h.b16 %v103
    %v619 = vunpack.c.l.b16 %v104
    %v620 = vunpack.c.h.b16 %v104
    %v621 = vunpack.c.l.b16 %v105
    %v622 = vunpack.c.h.b16 %v105
    %v623 = vunpack.c.l.b16 %v106
    %v624 = vunpack.c.h.b16 %v106
    %v625 = vunpack.c.l.b16 %v107
    %v626 = vunpack.c.h.b16 %v107
    %v627 = vunpack.c.l.b16 %v108
    %v628 = vunpack.c.h.b16 %v108
    %v629 = vunpack.c.l.b16 %v109
    %v630 = vunpack.c.h.b16 %v109
    %v631 = vunpack.c.l.b16 %v110
    %v632 = vunpack.c.h.b16 %v110
    %v633 = vunpack.c.l.b16 %v111
    %v634 = vunpack.c.h.b16 %v111
    %v635 = vunpack.c.l.b16 %v112
    %v636 = vunpack.c.h.b16 %v112
    %v637 = vunpack.c.l.b16 %v113
    %v638 = vunpack.c.h.b16 %v113
    %v639 = vunpack.c.l.b16 %v114
    %v640 = vunpack.c.h.b16 %v114
    %v641 = vunpack.c.l.b16 %v115
    %v642 = vunpack.c.h.b16 %v115
    %v643 = vunpack.c.l.b16 %v116
    %v644 = vunpack.c.h.b16 %v116
    %v645 = vunpack.c.l.b16 %v117
    %v646 = vunpack.c.h.b16 %v117
    %v647 = vunpack.c.l.b16 %v118
    %v648 = vunpack.c.h.b16 %v118
    %v649 = vunpack.c.l.b16 %v119
    %v650 = vunpack.c.h.b16 %v119
    %v651 = vunpack.c.l.b16 %v120
    %v652 = vunpack.c.h.b16 %v120
    %v653 = vunpack.c.l.b16 %v121
    %v654 = vunpack.c.h.b16 %v121
    %v655 = vunpack.c.l.b16 %v122
    %v656 = vunpack.c.h.b16 %v122
    %v657 = vunpack.c.l.b16 %v123
    %v658 = vunpack.c.h.b16 %v123
    %v659 = vunpack.c.l.b16 %v124
    %v660 = vunpack.c.h.b16 %v124
    %v661 = vunpack.c.l.b16 %v125
    %v662 = vunpack.c.h.b16 %v125
    %v663 = vunpack.c.l.b16 %v126
    %v664 = vunpack.c.h.b16 %v126
    %v665 = vunpack.c.l.b16 %v127
    %v666 = vunpack.c.h.b16 %v127
    %v667 = vunpack.c.l.b16 %v128
    %v668 = vunpack.c.h.b16 %v128
    %v669 = vunpack.c.l.b16 %v129
    %v670 = vunpack.c.h.b16 %v129
    %v671 = vunpack.c.l.b16 %v130
    %v672 = vunpack.c.h.b16 %v130
    %v673 = vunpack.c.l.b16 %v131
    %v674 = vunpack.c.h.b16 %v131
    %v675 = vunpack.c.l.b16 %v132
    %v676 = vunpack.c.h.b16 %v132
    %v677 = vunpack.c.l.b16 %v133
    %v678 = vunpack.c.h.b16 %v133
    %v679 = vunpack.c.l.b16 %v134
    %v680 = vunpack.c.h.b16 %v134
    %v681 = vunpack.c.l.b16 %v135
    %v682 = vunpack.c.h.b16 %v135
    %v683 = vunpack.c.l.b16 %v136
    %v684 = vunpack.c.h.b16 %v136
    %v685 = vunpack.c.l.b16 %v137
    %v686 = vunpack.c.h.b16 %v137
    %v687 = vunpack.c.l.b16 %v138
    %v688 = vunpack.c.h.b16 %v138
    %v689 = vunpack.c.l.b16 %v139
    %v690 = vunpack.c.h.b16 %v139
    %v691 = vpack.c.b16 %v565, %v563
    %v692 = vpack.c.b16 %v566, %v564
    %v693 = vpack.c.b16 %v569, %v567
    %v694 = vpack.c.b16 %v570, %v568
    %v695 = vpack.c.b16 %v573, %v571
    %v696 = vpack.c.b16 %v574, %v572
    %v697 = vpack.c.b16 %v577, %v575
    %v698 = vpack.c.b16 %v578, %v576
    %v699 = vpack.c.b16 %v581, %v579
    %v700 = vpack.c.b16 %v582, %v580
    %v701 = vpack.c.b16 %v585, %v583
    %v702 = vpack.c.b16 %v586, %v584
    %v703 = vpack.c.b16 %v589, %v587
    %v704 = vpack.c.b16 %v590, %v588
    %v705 = vpack.c.b16 %v593, %v591
    %v706 = vpack.c.b16 %v594, %v592
    %v707 = vpack.c.b16 %v597, %v595
    %v708 = vpack.c.b16 %v598, %v596
    %v709 = vpack.c.b16 %v601, %v599
    %v710 = vpack.c.b16 %v602, %v600
    %v711 = vpack.c.b16 %v605, %v603
    %v712 = vpack.c.b16 %v606, %v604
    %v713 = vpack.c.b16 %v609, %v607
    %v714 = vpack.c.b16 %v610, %v608
    %v715 = vpack.c.b16 %v613, %v611
    %v716 = vpack.c.b16 %v614, %v612
    %v717 = vpack.c.b16 %v617, %v615
    %v718 = vpack.c.b16 %v618, %v616
    %v719 = vpack.c.b16 %v621, %v619
    %v720 = vpack.c.b16 %v622, %v620
    %v721 = vpack.c.b16 %v625, %v623
    %v722 = vpack.c.b16 %v626, %v624
    %v723 = vpack.c.b16 %v629, %v627
    %v724 = vpack.c.b16 %v630, %v628
    %v725 = vpack.c.b16 %v633, %v631
    %v726 = vpack.c.b16 %v634, %v632
    %v727 = vpack.c.b16 %v637, %v635
    %v728 = vpack.c.b16 %v638, %v636
    %v729 = vpack.c.b16 %v641, %v639
    %v730 = vpack.c.b16 %v642, %v640
    %v731 = vpack.c.b16 %v645, %v643
    %v732 = vpack.c.b16 %v646, %v644
    %v733 = vpack.c.b16 %v649, %v647
    %v734 = vpack.c.b16 %v650, %v648
    %v735 = vpack.c.b16 %v653, %v651
    %v736 = vpack.c.b16 %v654, %v652
    %v737 = vpack.c.b16 %v657, %v655
    %v738 = vpack.c.b16 %v658, %v656
    %v739 = vpack.c.b16 %v661, %v659
    %v740 = vpack.c.b16 %v662, %v660
    %v741 = vpack.c.b16 %v665, %v663
    %v742 = vpack.c.b16 %v666, %v664
    %v743 = vpack.c.b16 %v669, %v667
    %v744 = vpack.c.b16 %v670, %v668
    %v745 = vpack.c.b16 %v673, %v671
    %v746 = vpack.c.b16 %v674, %v672
    %v747 = vpack.c.b16 %v677, %v675
    %v748 = vpack.c.b16 %v678, %v676
    %v749 = vpack.c.b16 %v681, %v679
    %v750 = vpack.c.b16 %v682, %v680
    %v751 = vpack.c.b16 %v685, %v683
    %v752 = vpack.c.b16 %v686, %v684
    %v753 = vpack.c.b16 %v689, %v687
    %v754 = vpack.c.b16 %v690, %v688
    %819 = vmatprep.subr.bf16.mxu0 %v692
    %820 = vmatpush1.bf16.msra.mxu0 %v691
    %821 = vmatprep.subr.bf16.mxu0 %v694
    %822 = vmatpush1.bf16.msra.mxu0 %v693
    %823 = vmatprep.subr.bf16.mxu0 %v696
    %824 = vmatpush1.bf16.msra.mxu0 %v695
    %825 = vmatprep.subr.bf16.mxu0 %v698
    %826 = vmatpush1.bf16.msra.mxu0 %v697
    %827 = vmatprep.subr.bf16.mxu0 %v700
    %828 = vmatpush1.bf16.msra.mxu0 %v699
    %829 = vmatprep.subr.bf16.mxu0 %v702
    %830 = vmatpush1.bf16.msra.mxu0 %v701
    %831 = vmatprep.subr.bf16.mxu0 %v704
    %832 = vmatpush1.bf16.msra.mxu0 %v703
    %833 = vmatprep.subr.bf16.mxu0 %v706
    %834 = vmatpush1.bf16.msra.mxu0 %v705
    %835 = vmatprep.subr.bf16.mxu0 %v708
    %836 = vmatpush1.bf16.msra.mxu0 %v707
    %837 = vmatprep.subr.bf16.mxu0 %v710
    %838 = vmatpush1.bf16.msra.mxu0 %v709
    %839 = vmatprep.subr.bf16.mxu0 %v712
    %840 = vmatpush1.bf16.msra.mxu0 %v711
    %841 = vmatprep.subr.bf16.mxu0 %v714
    %842 = vmatpush1.bf16.msra.mxu0 %v713
    %843 = vmatprep.subr.bf16.mxu0 %v716
    %844 = vmatpush1.bf16.msra.mxu0 %v715
    %845 = vmatprep.subr.bf16.mxu0 %v718
    %846 = vmatpush1.bf16.msra.mxu0 %v717
    %847 = vmatprep.subr.bf16.mxu0 %v720
    %848 = vmatpush1.bf16.msra.mxu0 %v719
    %849 = vmatprep.subr.bf16.mxu0 %v722
    %850 = vmatpush1.bf16.msra.mxu0 %v721
    %851 = vmatprep.mubr.bf16.mxu0 %v496
    %852 = vmatmul.mubr.bf16.gmra.mrb[0].mxu0 %v495
    %v853 = vpop.f32.mrb[0].mxu0
    %v854 = vadd.f32 %v68, %v853
    %v855 = vpop.f32.mrb[0].mxu0
    %v856 = vadd.f32 %v72, %v855
    %v857 = vpop.f32.mrb[0].mxu0
    %v858 = vpop.f32.mrb[0].mxu0
    %859 = vdwg.mxu0
    %860 = vmatprep.subr.bf16.mxu0 %v724
    %861 = vmatpush1.bf16.msra.mxu0 %v723
    %862 = vmatprep.subr.bf16.mxu0 %v726
    %863 = vmatpush1.bf16.msra.mxu0 %v725
    %864 = vmatprep.subr.bf16.mxu0 %v728
    %865 = vmatpush1.bf16.msra.mxu0 %v727
    %866 = vmatprep.subr.bf16.mxu0 %v730
    %867 = vmatpush1.bf16.msra.mxu0 %v729
    %868 = vmatprep.subr.bf16.mxu0 %v732
    %869 = vmatpush1.bf16.msra.mxu0 %v731
    %870 = vmatprep.subr.bf16.mxu0 %v734
    %871 = vmatpush1.bf16.msra.mxu0 %v733
    %872 = vmatprep.subr.bf16.mxu0 %v736
    %873 = vmatpush1.bf16.msra.mxu0 %v735
    %874 = vmatprep.subr.bf16.mxu0 %v738
    %875 = vmatpush1.bf16.msra.mxu0 %v737
    %876 = vmatprep.subr.bf16.mxu0 %v740
    %877 = vmatpush1.bf16.msra.mxu0 %v739
    %878 = vmatprep.subr.bf16.mxu0 %v742
    %879 = vmatpush1.bf16.msra.mxu0 %v741
    %880 = vmatprep.subr.bf16.mxu0 %v744
    %881 = vmatpush1.bf16.msra.mxu0 %v743
    %882 = vmatprep.subr.bf16.mxu0 %v746
    %883 = vmatpush1.bf16.msra.mxu0 %v745
    %884 = vmatprep.subr.bf16.mxu0 %v748
    %885 = vmatpush1.bf16.msra.mxu0 %v747
    %886 = vmatprep.subr.bf16.mxu0 %v750
    %887 = vmatpush1.bf16.msra.mxu0 %v749
    %888 = vmatprep.subr.bf16.mxu0 %v752
    %889 = vmatpush1.bf16.msra.mxu0 %v751
    %890 = vmatprep.subr.bf16.mxu0 %v754
    %891 = vmatpush1.bf16.msra.mxu0 %v753
    %892 = vmatprep.mubr.bf16.mxu0 %v498
    %893 = vmatmul.mubr.bf16.gmra.mrb[0].mxu0 %v497
    %v894 = vpop.f32.mrb[0].mxu0
    %v895 = vadd.f32 %v854, %v894
    %v896 = vpop.f32.mrb[0].mxu0
    %v897 = vadd.f32 %v856, %v896
    %v898 = vpop.f32.mrb[0].mxu0
    %v899 = vpop.f32.mrb[0].mxu0
    %900 = vdwg.mxu0
    %v901 = vmax.f32 %v895, 0.0
    %v902 = vmax.f32 %v897, 0.0
    %v903 = vpack.c.bf16 %v901, %v901
    %v904 = vpack.c.bf16 %v902, %v902
    %v907 = vunpack.c.l.b16 %v140
    %v908 = vunpack.c.h.b16 %v140
    %v909 = vunpack.c.l.b16 %v141
    %v910 = vunpack.c.h.b16 %v141
    %v911 = vpack.c.b16 %v909, %v907
    %v912 = vpack.c.b16 %v910, %v908
    %915 = vmatprep.subr.bf16.mxu0 %v912
    %916 = vmatpush1.bf16.xpose.msra.mxu0 %v911
    %917 = vmatprep.subr.bf16.mxu0 0
    %918 = vmatpush1.bf16.xpose.msra.mxu0 0
    %919 = vmatprep.subr.bf16.mxu0 0
    %920 = vmatpush1.bf16.xpose.msra.mxu0 0
    %921 = vmatprep.subr.bf16.mxu0 0
    %922 = vmatpush1.bf16.xpose.msra.mxu0 0
    %923 = vmatprep.subr.bf16.mxu0 0
    %924 = vmatpush1.bf16.xpose.msra.mxu0 0
    %925 = vmatprep.subr.bf16.mxu0 0
    %926 = vmatpush1.bf16.xpose.msra.mxu0 0
    %927 = vmatprep.subr.bf16.mxu0 0
    %928 = vmatpush1.bf16.xpose.msra.mxu0 0
    %929 = vmatprep.subr.bf16.mxu0 0
    %930 = vmatpush1.bf16.xpose.msra.mxu0 0
    %931 = vmatprep.subr.bf16.mxu0 0
    %932 = vmatpush1.bf16.xpose.msra.mxu0 0
    %933 = vmatprep.subr.bf16.mxu0 0
    %934 = vmatpush1.bf16.xpose.msra.mxu0 0
    %935 = vmatprep.subr.bf16.mxu0 0
    %936 = vmatpush1.bf16.xpose.msra.mxu0 0
    %937 = vmatprep.subr.bf16.mxu0 0
    %938 = vmatpush1.bf16.xpose.msra.mxu0 0
    %939 = vmatprep.subr.bf16.mxu0 0
    %940 = vmatpush1.bf16.xpose.msra.mxu0 0
    %941 = vmatprep.subr.bf16.mxu0 0
    %942 = vmatpush1.bf16.xpose.msra.mxu0 0
    %943 = vmatprep.subr.bf16.mxu0 0
    %944 = vmatpush1.bf16.xpose.msra.mxu0 0
    %945 = vmatprep.subr.bf16.mxu0 0
    %946 = vmatpush1.bf16.xpose.msra.mxu0 0
    %947 = vmatprep.mubr.bf16.mxu0 %v904
    %948 = vmatmul.mubr.bf16.gmra.mrb[0].mxu0 %v903
    %v949 = vpop.f32.mrb[0].mxu0
    %v950 = vadd.f32 %v75, %v949
    %v951 = vpop.f32.mrb[0].mxu0
    %v952 = vpop.f32.mrb[0].mxu0
    %v953 = vpop.f32.mrb[0].mxu0
    %954 = vdwg.mxu0
    %vm955 = vcmask 74752
    %v956 = vsel %vm955, %v950, -inf
    %957 = vmax.xlane.f32.xlu0 %v956
    %v958 = vpop.xlane.xlu0 %957
    %v959 = vsub.f32 %v950, %v958
    %v960 = vmul.f32 %v959, 1.442695
    %v961 = vpow.pop %v960
    %v962 = vsel %vm955, %v961, 0.0
    %963 = vadd.xlane.f32.xlu0 %v962
    %v964 = vpop.xlane.xlu0 %963
    %v965 = vrcp.pop %v964
    %v966 = vmul.f32 %v961, %v965
    %v967 = vsub.f32 %v966, %v150
    %v968 = vpack.c.bf16 %v967, %v967
    %vm969 = vcmask 80896
    %v971 = vsel %vm969, %v968, 0
    %vm973 = vcmask 1044480
    %v975 = vsel %vm973, %v911, 0
    %v978 = vsel %vm973, %v912, 0
    %980 = vmatprep.subr.bf16.mxu0 %v978
    %981 = vmatpush1.bf16.msra.mxu0 %v975
    %982 = vmatprep.subr.bf16.mxu0 0
    %983 = vmatpush1.bf16.msra.mxu0 0
    %984 = vmatprep.subr.bf16.mxu0 0
    %985 = vmatpush1.bf16.msra.mxu0 0
    %986 = vmatprep.subr.bf16.mxu0 0
    %987 = vmatpush1.bf16.msra.mxu0 0
    %988 = vmatprep.subr.bf16.mxu0 0
    %989 = vmatpush1.bf16.msra.mxu0 0
    %990 = vmatprep.subr.bf16.mxu0 0
    %991 = vmatpush1.bf16.msra.mxu0 0
    %992 = vmatprep.subr.bf16.mxu0 0
    %993 = vmatpush1.bf16.msra.mxu0 0
    %994 = vmatprep.subr.bf16.mxu0 0
    %995 = vmatpush1.bf16.msra.mxu0 0
    %996 = vmatprep.subr.bf16.mxu0 0
    %997 = vmatpush1.bf16.msra.mxu0 0
    %998 = vmatprep.subr.bf16.mxu0 0
    %999 = vmatpush1.bf16.msra.mxu0 0
    %1000 = vmatprep.subr.bf16.mxu0 0
    %1001 = vmatpush1.bf16.msra.mxu0 0
    %1002 = vmatprep.subr.bf16.mxu0 0
    %1003 = vmatpush1.bf16.msra.mxu0 0
    %1004 = vmatprep.subr.bf16.mxu0 0
    %1005 = vmatpush1.bf16.msra.mxu0 0
    %1006 = vmatprep.subr.bf16.mxu0 0
    %1007 = vmatpush1.bf16.msra.mxu0 0
    %1008 = vmatprep.subr.bf16.mxu0 0
    %1009 = vmatpush1.bf16.msra.mxu0 0
    %1010 = vmatprep.subr.bf16.mxu0 0
    %1011 = vmatpush1.bf16.msra.mxu0 0
    %1012 = vmatprep.mubr.bf16.mxu0 0
    %1013 = vmatmul.mubr.bf16.gmra.mrb[0].mxu0 %v971
    %v1014 = vpop.f32.mrb[0].mxu0
    %v1015 = vadd.f32 0.0, %v1014
    %v1016 = vpop.f32.mrb[0].mxu0
    %v1017 = vadd.f32 0.0, %v1016
    %v1018 = vpop.f32.mrb[0].mxu0
    %v1019 = vpop.f32.mrb[0].mxu0
    %1020 = vdwg.mxu0
    %vm1021 = vcmp.gt.f32.partialorder %v895, 0.0
    %vm1022 = vcmp.gt.f32.partialorder %v897, 0.0
    %v1023 = vsel %vm1021, %v1015, 0.0
    %v1024 = vsel %vm1022, %v1017, 0.0
    %v1025 = vpack.c.bf16 %v1023, %v1023
    %v1026 = vpack.c.bf16 %v1024, %v1024
    %1027 = vmatprep.subr.bf16.mxu0 %v692
    %1028 = vmatpush1.bf16.xpose.msra.mxu0 %v691
    %1029 = vmatprep.subr.bf16.mxu0 %v694
    %1030 = vmatpush1.bf16.xpose.msra.mxu0 %v693
    %1031 = vmatprep.subr.bf16.mxu0 %v696
    %1032 = vmatpush1.bf16.xpose.msra.mxu0 %v695
    %1033 = vmatprep.subr.bf16.mxu0 %v698
    %1034 = vmatpush1.bf16.xpose.msra.mxu0 %v697
    %1035 = vmatprep.subr.bf16.mxu0 %v700
    %1036 = vmatpush1.bf16.xpose.msra.mxu0 %v699
    %1037 = vmatprep.subr.bf16.mxu0 %v702
    %1038 = vmatpush1.bf16.xpose.msra.mxu0 %v701
    %1039 = vmatprep.subr.bf16.mxu0 %v704
    %1040 = vmatpush1.bf16.xpose.msra.mxu0 %v703
    %1041 = vmatprep.subr.bf16.mxu0 %v706
    %1042 = vmatpush1.bf16.xpose.msra.mxu0 %v705
    %1043 = vmatprep.subr.bf16.mxu0 %v708
    %1044 = vmatpush1.bf16.xpose.msra.mxu0 %v707
    %1045 = vmatprep.subr.bf16.mxu0 %v710
    %1046 = vmatpush1.bf16.xpose.msra.mxu0 %v709
    %1047 = vmatprep.subr.bf16.mxu0 %v712
    %1048 = vmatpush1.bf16.xpose.msra.mxu0 %v711
    %1049 = vmatprep.subr.bf16.mxu0 %v714
    %1050 = vmatpush1.bf16.xpose.msra.mxu0 %v713
    %1051 = vmatprep.subr.bf16.mxu0 %v716
    %1052 = vmatpush1.bf16.xpose.msra.mxu0 %v715
    %1053 = vmatprep.subr.bf16.mxu0 %v718
    %1054 = vmatpush1.bf16.xpose.msra.mxu0 %v717
    %1055 = vmatprep.subr.bf16.mxu0 %v720
    %1056 = vmatpush1.bf16.xpose.msra.mxu0 %v719
    %1057 = vmatprep.subr.bf16.mxu0 %v722
    %1058 = vmatpush1.bf16.xpose.msra.mxu0 %v721
    %1059 = vmatprep.mubr.bf16.mxu0 %v1026
    %1060 = vmatmul.mubr.bf16.gmra.mrb[0].mxu0 %v1025
    %v1061 = vpop.f32.mrb[0].mxu0
    %v1062 = vadd.f32 0.0, %v1061
    %v1063 = vpop.f32.mrb[0].mxu0
    %v1064 = vadd.f32 0.0, %v1063
    %v1065 = vpop.f32.mrb[0].mxu0
    %v1066 = vpop.f32.mrb[0].mxu0
    %1067 = vdwg.mxu0
    %1068 = vmatprep.subr.bf16.mxu0 %v724
    %1069 = vmatpush1.bf16.xpose.msra.mxu0 %v723
    %1070 = vmatprep.subr.bf16.mxu0 %v726
    %1071 = vmatpush1.bf16.xpose.msra.mxu0 %v725
    %1072 = vmatprep.subr.bf16.mxu0 %v728
    %1073 = vmatpush1.bf16.xpose.msra.mxu0 %v727
    %1074 = vmatprep.subr.bf16.mxu0 %v730
    %1075 = vmatpush1.bf16.xpose.msra.mxu0 %v729
    %1076 = vmatprep.subr.bf16.mxu0 %v732
    %1077 = vmatpush1.bf16.xpose.msra.mxu0 %v731
    %1078 = vmatprep.subr.bf16.mxu0 %v734
    %1079 = vmatpush1.bf16.xpose.msra.mxu0 %v733
    %1080 = vmatprep.subr.bf16.mxu0 %v736
    %1081 = vmatpush1.bf16.xpose.msra.mxu0 %v735
    %1082 = vmatprep.subr.bf16.mxu0 %v738
    %1083 = vmatpush1.bf16.xpose.msra.mxu0 %v737
    %1084 = vmatprep.subr.bf16.mxu0 %v740
    %1085 = vmatpush1.bf16.xpose.msra.mxu0 %v739
    %1086 = vmatprep.subr.bf16.mxu0 %v742
    %1087 = vmatpush1.bf16.xpose.msra.mxu0 %v741
    %1088 = vmatprep.subr.bf16.mxu0 %v744
    %1089 = vmatpush1.bf16.xpose.msra.mxu0 %v743
    %1090 = vmatprep.subr.bf16.mxu0 %v746
    %1091 = vmatpush1.bf16.xpose.msra.mxu0 %v745
    %1092 = vmatprep.subr.bf16.mxu0 %v748
    %1093 = vmatpush1.bf16.xpose.msra.mxu0 %v747
    %1094 = vmatprep.subr.bf16.mxu0 %v750
    %1095 = vmatpush1.bf16.xpose.msra.mxu0 %v749
    %1096 = vmatprep.subr.bf16.mxu0 %v752
    %1097 = vmatpush1.bf16.xpose.msra.mxu0 %v751
    %1098 = vmatprep.subr.bf16.mxu0 %v754
    %1099 = vmatpush1.bf16.xpose.msra.mxu0 %v753
    %1100 = vmatprep.mubr.bf16.mxu0 %v1026
    %1101 = vmatmul.mubr.bf16.gmra.mrb[0].mxu0 %v1025
    %v1102 = vpop.f32.mrb[0].mxu0
    %v1103 = vadd.f32 0.0, %v1102
    %v1104 = vpop.f32.mrb[0].mxu0
    %v1105 = vadd.f32 0.0, %v1104
    %v1106 = vpop.f32.mrb[0].mxu0
    %v1107 = vpop.f32.mrb[0].mxu0
    %1108 = vdwg.mxu0
    %vm1109 = vcmp.gt.f32.partialorder %v416, 0.0
    %vm1110 = vcmp.gt.f32.partialorder %v418, 0.0
    %vm1111 = vcmp.gt.f32.partialorder %v487, 0.0
    %vm1112 = vcmp.gt.f32.partialorder %v489, 0.0
    %v1113 = vsel %vm1109, %v1062, 0.0
    %v1114 = vsel %vm1110, %v1064, 0.0
    %v1115 = vsel %vm1111, %v1103, 0.0
    %v1116 = vsel %vm1112, %v1105, 0.0
    %vm1117 = vcmask 15360
    %v1119 = vsel %vm1117, %v168, 0
    %vm1121 = vcmask 1041408
    %v1123 = vsel %vm1121, %v1113, 0
    %v1126 = vsel %vm1121, %v1114, 0
    %v1129 = vsel %vm1121, %v1115, 0
    %v1132 = vsel %vm1121, %v1116, 0
    %1134 = vmatprep.subr.mxu0 %v1126
    %1135 = vmatpush1.msra.mxu0 %v1123
    %1136 = vmatprep.subr.mxu0 0.0
    %1137 = vmatpush1.msra.mxu0 0.0
    %1138 = vmatprep.subr.mxu0 0.0
    %1139 = vmatpush1.msra.mxu0 0.0
    %1140 = vmatprep.subr.mxu0 0.0
    %1141 = vmatpush1.msra.mxu0 0.0
    %1142 = vmatprep.subr.mxu0 0.0
    %1143 = vmatpush1.msra.mxu0 0.0
    %1144 = vmatprep.subr.mxu0 0.0
    %1145 = vmatpush1.msra.mxu0 0.0
    %1146 = vmatprep.subr.mxu0 0.0
    %1147 = vmatpush1.msra.mxu0 0.0
    %1148 = vmatprep.subr.mxu0 0.0
    %1149 = vmatpush1.msra.mxu0 0.0
    %1150 = vmatprep.subr.mxu0 0.0
    %1151 = vmatpush1.msra.mxu0 0.0
    %1152 = vmatprep.subr.mxu0 0.0
    %1153 = vmatpush1.msra.mxu0 0.0
    %1154 = vmatprep.subr.mxu0 0.0
    %1155 = vmatpush1.msra.mxu0 0.0
    %1156 = vmatprep.subr.mxu0 0.0
    %1157 = vmatpush1.msra.mxu0 0.0
    %1158 = vmatprep.subr.mxu0 0.0
    %1159 = vmatpush1.msra.mxu0 0.0
    %1160 = vmatprep.subr.mxu0 0.0
    %1161 = vmatpush1.msra.mxu0 0.0
    %1162 = vmatprep.subr.mxu0 0.0
    %1163 = vmatpush1.msra.mxu0 0.0
    %1164 = vmatprep.subr.mxu0 0.0
    %1165 = vmatpush1.msra.mxu0 0.0
    %1166 = vmatprep.subr.mxu0 0.0
    %1167 = vmatpush1.msra.mxu0 0.0
    %1168 = vmatprep.subr.mxu0 0.0
    %1169 = vmatpush1.msra.mxu0 0.0
    %1170 = vmatprep.subr.mxu0 0.0
    %1171 = vmatpush1.msra.mxu0 0.0
    %1172 = vmatprep.subr.mxu0 0.0
    %1173 = vmatpush1.msra.mxu0 0.0
    %1174 = vmatprep.subr.mxu0 0.0
    %1175 = vmatpush1.msra.mxu0 0.0
    %1176 = vmatprep.subr.mxu0 0.0
    %1177 = vmatpush1.msra.mxu0 0.0
    %1178 = vmatprep.subr.mxu0 0.0
    %1179 = vmatpush1.msra.mxu0 0.0
    %1180 = vmatprep.subr.mxu0 0.0
    %1181 = vmatpush1.msra.mxu0 0.0
    %1182 = vmatprep.subr.mxu0 0.0
    %1183 = vmatpush1.msra.mxu0 0.0
    %1184 = vmatprep.subr.mxu0 0.0
    %1185 = vmatpush1.msra.mxu0 0.0
    %1186 = vmatprep.subr.mxu0 0.0
    %1187 = vmatpush1.msra.mxu0 0.0
    %1188 = vmatprep.subr.mxu0 0.0
    %1189 = vmatpush1.msra.mxu0 0.0
    %1190 = vmatprep.subr.mxu0 0.0
    %1191 = vmatpush1.msra.mxu0 0.0
    %1192 = vmatprep.subr.mxu0 0.0
    %1193 = vmatpush1.msra.mxu0 0.0
    %1194 = vmatprep.subr.mxu0 0.0
    %1195 = vmatpush1.msra.mxu0 0.0
    %1196 = vmatprep.subr.mxu0 0.0
    %1197 = vmatpush1.msra.mxu0 0.0
    %1198 = vmatprep.mubr.f32.mxu0 0.0
    %1199 = vmatmul.mubr.f32.gmra.mrb[0].mxu0 %v1119
    %v1200 = vpop.f32.mrb[0].mxu0
    %v1201 = vadd.f32 0.0, %v1200
    %v1202 = vpop.f32.mrb[0].mxu0
    %v1203 = vadd.f32 0.0, %v1202
    %1204 = vdwg.mxu0
    %1205 = vmatprep.subr.mxu0 %v1132
    %1206 = vmatpush1.msra.mxu0 %v1129
    %1207 = vmatprep.subr.mxu0 0.0
    %1208 = vmatpush1.msra.mxu0 0.0
    %1209 = vmatprep.subr.mxu0 0.0
    %1210 = vmatpush1.msra.mxu0 0.0
    %1211 = vmatprep.subr.mxu0 0.0
    %1212 = vmatpush1.msra.mxu0 0.0
    %1213 = vmatprep.subr.mxu0 0.0
    %1214 = vmatpush1.msra.mxu0 0.0
    %1215 = vmatprep.subr.mxu0 0.0
    %1216 = vmatpush1.msra.mxu0 0.0
    %1217 = vmatprep.subr.mxu0 0.0
    %1218 = vmatpush1.msra.mxu0 0.0
    %1219 = vmatprep.subr.mxu0 0.0
    %1220 = vmatpush1.msra.mxu0 0.0
    %1221 = vmatprep.subr.mxu0 0.0
    %1222 = vmatpush1.msra.mxu0 0.0
    %1223 = vmatprep.subr.mxu0 0.0
    %1224 = vmatpush1.msra.mxu0 0.0
    %1225 = vmatprep.subr.mxu0 0.0
    %1226 = vmatpush1.msra.mxu0 0.0
    %1227 = vmatprep.subr.mxu0 0.0
    %1228 = vmatpush1.msra.mxu0 0.0
    %1229 = vmatprep.subr.mxu0 0.0
    %1230 = vmatpush1.msra.mxu0 0.0
    %1231 = vmatprep.subr.mxu0 0.0
    %1232 = vmatpush1.msra.mxu0 0.0
    %1233 = vmatprep.subr.mxu0 0.0
    %1234 = vmatpush1.msra.mxu0 0.0
    %1235 = vmatprep.subr.mxu0 0.0
    %1236 = vmatpush1.msra.mxu0 0.0
    %1237 = vmatprep.subr.mxu0 0.0
    %1238 = vmatpush1.msra.mxu0 0.0
    %1239 = vmatprep.subr.mxu0 0.0
    %1240 = vmatpush1.msra.mxu0 0.0
    %1241 = vmatprep.subr.mxu0 0.0
    %1242 = vmatpush1.msra.mxu0 0.0
    %1243 = vmatprep.subr.mxu0 0.0
    %1244 = vmatpush1.msra.mxu0 0.0
    %1245 = vmatprep.subr.mxu0 0.0
    %1246 = vmatpush1.msra.mxu0 0.0
    %1247 = vmatprep.subr.mxu0 0.0
    %1248 = vmatpush1.msra.mxu0 0.0
    %1249 = vmatprep.subr.mxu0 0.0
    %1250 = vmatpush1.msra.mxu0 0.0
    %1251 = vmatprep.subr.mxu0 0.0
    %1252 = vmatpush1.msra.mxu0 0.0
    %1253 = vmatprep.subr.mxu0 0.0
    %1254 = vmatpush1.msra.mxu0 0.0
    %1255 = vmatprep.subr.mxu0 0.0
    %1256 = vmatpush1.msra.mxu0 0.0
    %1257 = vmatprep.subr.mxu0 0.0
    %1258 = vmatpush1.msra.mxu0 0.0
    %1259 = vmatprep.subr.mxu0 0.0
    %1260 = vmatpush1.msra.mxu0 0.0
    %1261 = vmatprep.subr.mxu0 0.0
    %1262 = vmatpush1.msra.mxu0 0.0
    %1263 = vmatprep.subr.mxu0 0.0
    %1264 = vmatpush1.msra.mxu0 0.0
    %1265 = vmatprep.subr.mxu0 0.0
    %1266 = vmatpush1.msra.mxu0 0.0
    %1267 = vmatprep.subr.mxu0 0.0
    %1268 = vmatpush1.msra.mxu0 0.0
    %1269 = vmatprep.mubr.f32.mxu0 0.0
    %1270 = vmatmul.mubr.f32.gmra.mrb[0].mxu0 %v1119
    %v1271 = vpop.f32.mrb[0].mxu0
    %v1272 = vadd.f32 0.0, %v1271
    %v1273 = vpop.f32.mrb[0].mxu0
    %v1274 = vadd.f32 0.0, %v1273
    %1275 = vdwg.mxu0
    %v1276 = vmul.f32 %v1201, %v259
    %v1277 = vmul.f32 %v1203, %v261
    %v1278 = vmul.f32 %v1272, %v330
    %v1279 = vmul.f32 %v1274, %v332
    %v1280 = vadd.f32 %v1276, %v1277
    %v1281 = vadd.f32 %v1280, %v1278
    %v1282 = vadd.f32 %v1281, %v1279
    %1283 = vadd.xlane.f32.xlu0 %v1282
    %v1284 = vpop.xlane.xlu0 %1283
    %vm1285 = vcmp.gt.f32.partialorder %v1284, 0.0
    %vm1286 = vcmp.lt.f32.partialorder %v1284, 0.0
    %v1287 = vsel %vm1286, -1.0, 0.0
    %v1288 = vsel %vm1285, 1.0, %v1287
    %v1289 = vadd.f32 %v334, %v1288
    %v1290 = vadd.f32 %v335, %v1288
    %v1291 = vmax.f32 %v1289, 0.0
    %v1292 = vmax.f32 %v1290, 0.0
    %v1293 = vmin.f32 %v1291, 1.0
    %v1294 = vmin.f32 %v1292, 1.0
    %1295 = vst [vmem:[%s5] sm:$0xff] %v1293
    %1296 = vst [vmem:[%s5 + $0x8] sm:$0xff] %v1294
    // Predicated region
    $region26: #{_augment_jit.1} parent=1 // pred_check
      _
    $region27: #{_augment_jit.1} parent=1 // pred_check_branch
      %1298 = sbr.rel (0) target = $region29
    $region28: #{_augment_jit.1} parent=1 // pred_region
      _
    $region29: #{_augment_jit.1} parent=1 // pred_fallthru
      _
    // Predicated region
    $region30: #{_augment_jit.1} parent=1 // pred_check
      _
    $region31: #{_augment_jit.1} parent=1 // pred_check_branch
      %1300 = sbr.rel (0) target = $region33
    $region32: #{_augment_jit.1} parent=1 // pred_region
      _
    $region33: #{_augment_jit.1} parent=1 // pred_fallthru
      _
    %1301 = vsyncpa [#allocation3], 1

</llo_original>
